<compile_context>
chip_gen: v5e
topology: v5e:2x2
jax: 0.10.0
libtpu: 0.0.40
codegen_flags: <defaults>
</compile_context>

<pallas_src>
import jax
import jax.numpy as jnp
from jax.experimental import pallas as pl
from jax.experimental.pallas import tpu as pltpu


def _identity_copy_kernel(x_ref, o_ref):
    # x_ref: (C, D) slab x[a, b, :, :]
    # o_ref: (C, D) slab out[b, :, a, :]  (presented as the lane chunk
    #        out3[b, :, a*D:(a+1)*D] of the (B, C, A*D) output view)
    # The permutation lives entirely in the BlockSpec index_maps, so this is a
    # pure DMA-bound copy: no transpose, no XLU/VPU work.
    o_ref[...] = x_ref[...]


def non_redundant_transpose(x: jax.Array) -> jax.Array:
    """Pallas implementation of x.transpose(1, 2).transpose(0, 2)."""
    A, B, C, D = x.shape

    out3 = pl.pallas_call(
        _identity_copy_kernel,
        out_shape=jax.ShapeDtypeStruct((B, C, A * D), x.dtype),
        grid=(B, A),
        in_specs=[
            # x[a, b, :, :] -> kernel sees a (C, D) block (last two dims span
            # the full array dims, so the block is always layout-clean).
            pl.BlockSpec((None, None, C, D), lambda b, a: (a, b, 0, 0)),
        ],
        # Output viewed as (B, C, A*D): step (b, a) writes the D-wide lane
        # chunk out3[b, :, a*D:(a+1)*D] == out[b, :, a, :].
        out_specs=pl.BlockSpec((None, C, D), lambda b, a: (b, 0, a)),
        compiler_params=pltpu.CompilerParams(
            dimension_semantics=("parallel", "parallel")
        ),
    )(x)

    # (B, C, A*D) -> (B, C, A, D): A and D are adjacent, so this is a free view.
    return out3.reshape(B, C, A, D)


if __name__ == "__main__":
    key = jax.random.PRNGKey(0)
    # Small 4-D input; D = 128 keeps every output store lane-aligned & unmasked.
    A, B, C, D = 2, 4, 16, 128
    x = jax.random.normal(key, (A, B, C, D), dtype=jnp.float32)

    out = jax.block_until_ready(non_redundant_transpose(x))

    # Reference: same double-transpose in plain JAX.
    ref = jnp.transpose(x, (1, 2, 0, 3))
    assert out.shape == (B, C, A, D), out.shape
    assert jnp.array_equal(out, ref), "mismatch vs reference permutation"

    print("KERNEL_OK")
</pallas_src>

<mosaic_0001>
module attributes {stable_mosaic.version = 11 : i64} {
  func.func @_identity_copy_kernel(%arg0: i32, %arg1: i32, %arg2: memref<1x1x16x128xf32, #tpu.memory_space<vmem>>, %arg3: memref<1x16x128xf32, #tpu.memory_space<vmem>>) attributes {dimension_semantics = [#tpu.dimension_semantics<parallel>, #tpu.dimension_semantics<parallel>], iteration_bounds = array<i64: 4, 2>, scalar_prefetch = 0 : i64, scratch_operands = 0 : i64, tpu.core_type = #tpu.core_type<tc>, window_params = [{transform_indices = @transform_0, window_bounds = array<i64: 1, 1, 16, 128>}, {transform_indices = @transform_1, window_bounds = array<i64: 1, 16, 128>}]} {
    %c0 = arith.constant 0 : index
    %c0_0 = arith.constant 0 : index
    %c0_1 = arith.constant 0 : index
    %c0_2 = arith.constant 0 : index
    %0 = vector.load %arg2[%c0, %c0_0, %c0_1, %c0_2] : memref<1x1x16x128xf32, #tpu.memory_space<vmem>>, vector<1x1x16x128xf32>
    %1 = vector.shape_cast %0 : vector<1x1x16x128xf32> to vector<16x128xf32>
    %c0_3 = arith.constant 0 : index
    %c0_4 = arith.constant 0 : index
    %c0_5 = arith.constant 0 : index
    %2 = vector.load %arg3[%c0_3, %c0_4, %c0_5] : memref<1x16x128xf32, #tpu.memory_space<vmem>>, vector<1x16x128xf32>
    %3 = vector.shape_cast %2 : vector<1x16x128xf32> to vector<16x128xf32>
    %4 = vector.shape_cast %1 : vector<16x128xf32> to vector<1x16x128xf32>
    tpu.vector_store %arg3[%c0_3, %c0_4, %c0_5], %4 {strides = array<i32>} : memref<1x16x128xf32, #tpu.memory_space<vmem>>, vector<1x16x128xf32>,
    return
  }
  func.func @transform_0(%arg0: i32, %arg1: i32) -> (i32, i32, i32, i32) {
    %c0_i32 = arith.constant 0 : i32
    %c0_i32_0 = arith.constant 0 : i32
    %c0_i32_1 = arith.constant 0 : i32
    return %arg1, %arg0, %c0_i32, %c0_i32_0 : i32, i32, i32, i32
  }
  func.func @transform_1(%arg0: i32, %arg1: i32) -> (i32, i32, i32) {
    %c0_i32 = arith.constant 0 : i32
    %c0_i32_0 = arith.constant 0 : i32
    return %arg0, %c0_i32, %arg1 : i32, i32, i32
  }
}

</mosaic_0001>

<llo_original>
// kernel: tpu_custom_call.1
$region0: #{tpu_custom_call.1}
  #allocation0 [shape = 'u32[]', space=smem, size = 0x4, offset = 0x4, fixed_abs, tag = 'smem constant byte address 0x4 - core index']
  #allocation1 [shape = 'u32[72,128]{1,0:T(1,128)}', space=vmem, size = 0x9000, scoped, tag = 'internal scratch']
  %s0 = inlined_call_operand.hbm [shape: f32[2,4,16,128], index: 0, kind: input, shape index: {}]
  %s1 = inlined_call_operand.hbm [shape: f32[4,16,256], index: 1, kind: output, shape index: {}]
  %s2 = sld [smem:[#allocation0]]
  $region41: #{tpu_custom_call.1} parent=0
    _
  %s4 = ssub.s32 1, %s2
  %s5 = scalar_select 0, %s4, %s2
  $region1: #{tpu_custom_call.1} parent=0
    #allocation2 [shape = 'u8[16384]{0}', space=vmem, size = 0x4000, scoped, tag = 'input window, operand 0']
    #allocation3 [shape = 's32[2]{0}', space=sflag, size = 0x8, scoped, tag = 'scoped memory for tpu_custom_call.1']
    #allocation4 [shape = 's32[2]{0}', space=sflag, size = 0x8, scoped, tag = 'scoped memory for tpu_custom_call.1']
    #allocation5 [shape = 'u8[16384]{0}', space=vmem, size = 0x4000, scoped, tag = 'output window, operand 0']
    %6 = vsyncpa [#allocation3], 0
    %s7 = scalar_lea.sflag [#allocation3], 1
    %8 = vsyncpa %s7, 0
    %9 = vsyncpa [#allocation4], 0
    %s10 = scalar_lea.sflag [#allocation4], 1
    %11 = vsyncpa %s10, 0
    loop: start=0, step=1, limit=10
    $region2: #{tpu_custom_call.1} parent=1 // loop_pre_header
      _
    $region3: #{tpu_custom_call.1} parent=1 // loop_header
      %s13 = sphi 0, %s17
      %p14 = scmp.ge.s32.totalorder %s13, 10
      %s20 = sphi 0, %s32
      %s21 = sphi 0, %s28
      %s22 = sphi 0, %s20
      %s23 = sphi 0, %s21
      %s24 = sphi 0, %s22
      %s25 = sphi 0, %s23
      %s37 = sphi 0, %s39
      %s40 = sphi 0, %s37
      %s41 = sphi 0, %s40
      %s57 = sphi 0, %s41
      %s65 = sphi 0, %s67
      %s68 = sphi 0, %s65
      %s69 = sphi 0, %s68
      %s85 = sphi 0, %s69
    $region4: #{tpu_custom_call.1} parent=1 // loop_header_branch
      %16 = sbr.rel (%p14) target = $region8
    $region5: #{tpu_custom_call.1} parent=1 // loop_body
      %s18 = ssub.s32 %s13, 1
      %s19 = ssub.s32 %s13, 2
      %s26 = sadd.s32 1, %s21
      %p27 = scmp.ge.s32.totalorder %s26, 2
      %s28 = scalar_select %p27, 0, %s26
      %s29 = sadd.s32 1, %s20
      %s30 = scalar_select %p27, %s29, %s20
      %p31 = scmp.ge.s32.totalorder %s30, 4
      %s32 = scalar_select %p31, 0, %s30
      %s33 = ssub.s32 %s21, %s28
      %s34 = ssub.s32 %s20, %s32
      %s35 = sor.u32 %s33, %s34
      %p36 = scmp.eq.s32.totalorder %s35, 0
      %s38 = sadd.s32 %s37, 1
      %s39 = scalar_select %p36, %s37, %s38
      %p42 = pneg %p36
      %p43 = scmp.eq.s32.totalorder %s13, 7
      %p44 = por %p42, %p43
      %p45 = scmp.ne.s32.totalorder %s37, %s40
      %p46 = scmp.eq.s32.totalorder %s13, 0
      %p47 = por %p45, %p46
      %p48 = scmp.ne.s32.totalorder %s37, %s40
      %p49 = scmp.eq.s32.totalorder %s18, 7
      %p50 = por %p48, %p49
      %p51 = scmp.ne.s32.totalorder %s40, %s41
      %p52 = scmp.eq.s32.totalorder %s18, 0
      %p53 = por %p51, %p52
      %p54 = scmp.ne.s32.totalorder %s40, %s41
      %p55 = scmp.eq.s32.totalorder %s19, 7
      %p56 = por %p54, %p55
      %p58 = scmp.ne.s32.totalorder %s41, %s57
      %p59 = scmp.eq.s32.totalorder %s19, 0
      %p60 = por %p58, %p59
      %s61 = ssub.s32 %s20, %s32
      %s62 = ssub.s32 %s21, %s28
      %s63 = sor.u32 %s61, %s62
      %p64 = scmp.eq.s32.totalorder %s63, 0
      %s66 = sadd.s32 %s65, 1
      %s67 = scalar_select %p64, %s65, %s66
      %p70 = pneg %p64
      %p71 = scmp.eq.s32.totalorder %s13, 7
      %p72 = por %p70, %p71
      %p73 = scmp.ne.s32.totalorder %s65, %s68
      %p74 = scmp.eq.s32.totalorder %s13, 0
      %p75 = por %p73, %p74
      %p76 = scmp.ne.s32.totalorder %s65, %s68
      %p77 = scmp.eq.s32.totalorder %s18, 7
      %p78 = por %p76, %p77
      %p79 = scmp.ne.s32.totalorder %s68, %s69
      %p80 = scmp.eq.s32.totalorder %s18, 0
      %p81 = por %p79, %p80
      %p82 = scmp.ne.s32.totalorder %s68, %s69
      %p83 = scmp.eq.s32.totalorder %s19, 7
      %p84 = por %p82, %p83
      %p86 = scmp.ne.s32.totalorder %s69, %s85
      %p87 = scmp.eq.s32.totalorder %s19, 0
      %p88 = por %p86, %p87
      %p89 = scmp.le.s32.totalorder 1, %s13
      %p90 = scmp.lt.s32.totalorder %s13, 9
      %p91 = pnand %p89, %p90
      %p92 = pneg %p91
      // Predicated region
      $region9: #{tpu_custom_call.1} parent=5 // pred_check
        _
      $region10: #{tpu_custom_call.1} parent=5 // pred_check_branch
        %94 = sbr.rel (%p91) target = $region12
      $region11: #{tpu_custom_call.1} parent=5 // pred_region
        %s95 = ssub.s32 %s13, 1
      $region12: #{tpu_custom_call.1} parent=5 // pred_fallthru
        _
      %p96 = scmp.lt.s32.totalorder %s13, 8
      // Predicated region
      $region13: #{tpu_custom_call.1} parent=5 // pred_check
        %p97 = pneg %p96
      $region14: #{tpu_custom_call.1} parent=5 // pred_check_branch
        %99 = sbr.rel (%p97) target = $region16
      $region15: #{tpu_custom_call.1} parent=5 // pred_region
        // Predicated region
        $region17: #{tpu_custom_call.1} parent=15 // pred_check
          %p100 = pneg %p47
        $region18: #{tpu_custom_call.1} parent=15 // pred_check_branch
          %102 = sbr.rel (%p100) target = $region20
        $region19: #{tpu_custom_call.1} parent=15 // pred_region
          %s103 = sand.u32 %s37, 1
          %s104 = scalar_lea.sflag [#allocation3], %s103
          %s105 = sand.u32 %s37, 1
          %s106 = smul.addr %s105, 16
          %s107 = scalar_lea.vmem [#allocation2], %s106
          %109 = vsyncadd %s104, 0
          %s110 = smul.addr %s20, 2
          %s111 = smul.addr %s21, 8
          %s112 = sadd.s32 %s110, %s111
          %s113 = smul.addr %s112, 8
          %s114 = scalar_lea.hbm %s0, %s113
          %s115 = sshll.u32 %s114, 4
          %s116 = int_to_ptr.hbm [resolvable:$true] %s115
          %s117 = sshll.u32 %s107, 4
          %s118 = int_to_ptr.vmem [resolvable:$true] %s117
          %123 = dma.hbm_to_vmem [thread:$0]  %s116, 256, %s118, %s104, 128, 128, 8
        $region20: #{tpu_custom_call.1} parent=15 // pred_fallthru
          _
      $region16: #{tpu_custom_call.1} parent=5 // pred_fallthru
        _
      %p124 = scmp.le.s32.totalorder 1, %s13
      %p125 = scmp.lt.s32.totalorder %s13, 9
      %p126 = pnand %p124, %p125
      %p127 = pneg %p126
      // Predicated region
      $region21: #{tpu_custom_call.1} parent=5 // pred_check
        _
      $region22: #{tpu_custom_call.1} parent=5 // pred_check_branch
        %129 = sbr.rel (%p126) target = $region24
      $region23: #{tpu_custom_call.1} parent=5 // pred_region
        %s130 = ssub.s32 %s13, 1
        %s131 = sand.u32 %s40, 1
        %s132 = scalar_lea.sflag [#allocation3], %s131
        %s133 = sand.u32 %s40, 1
        %s134 = smul.addr %s133, 16
        %s135 = scalar_lea.vmem [#allocation2], %s134
        // Predicated region
        $region25: #{tpu_custom_call.1} parent=23 // pred_check
          %p136 = pneg %p53
        $region26: #{tpu_custom_call.1} parent=23 // pred_check_branch
          %138 = sbr.rel (%p136) target = $region28
        $region27: #{tpu_custom_call.1} parent=23 // pred_region
          %140 = dma.done %s132, 256
        $region28: #{tpu_custom_call.1} parent=23 // pred_fallthru
          _
        %s141 = sand.u32 %s40, 1
        %s142 = scalar_lea.sflag [#allocation3], %s141
        %s143 = sand.u32 %s40, 1
        %s144 = smul.addr %s143, 16
        %s145 = scalar_lea.vmem [#allocation2], %s144
        %p146 = pneg %p53
        %p147 = pneg %p50
        %p148 = pneg %p81
        %p149 = pneg %p78
        %s150 = sand.u32 %s68, 1
        %s151 = scalar_lea.sflag [#allocation4], %s150
        %s152 = sand.u32 %s68, 1
        %s153 = smul.addr %s152, 16
        %s154 = scalar_lea.vmem [#allocation5], %s153
        %v155 = vld [vmem:[%s135] sm:$0xff]
        %v156 = vld [vmem:[%s135 + $0x8] sm:$0xff]
        %157 = vst [vmem:[%s154] sm:$0xff] %v155
        %158 = vst [vmem:[%s154 + $0x8] sm:$0xff] %v156
        %s159 = sand.u32 %s68, 1
        %s160 = scalar_lea.sflag [#allocation4], %s159
        %s161 = sand.u32 %s68, 1
        %s162 = smul.addr %s161, 16
        %s163 = scalar_lea.vmem [#allocation5], %s162
        // Predicated region
        $region29: #{tpu_custom_call.1} parent=23 // pred_check
          %p164 = pneg %p78
        $region30: #{tpu_custom_call.1} parent=23 // pred_check_branch
          %166 = sbr.rel (%p164) target = $region32
        $region31: #{tpu_custom_call.1} parent=23 // pred_region
          %168 = vsyncadd %s160, 0
          %s169 = smul.addr %s22, 4
          %s170 = sadd.s32 %s23, %s169
          %s171 = smul.addr %s170, 8
          %s172 = scalar_lea.hbm %s1, %s171
          %s173 = sshll.u32 %s163, 4
          %s174 = int_to_ptr.vmem [resolvable:$true] %s173
          %s175 = sshll.u32 %s172, 4
          %s176 = int_to_ptr.hbm [resolvable:$true] %s175
          %181 = dma.vmem_to_hbm [thread:$0]  %s174, 256, %s176, %s160, 128, 256, 8
        $region32: #{tpu_custom_call.1} parent=23 // pred_fallthru
          _
      $region24: #{tpu_custom_call.1} parent=5 // pred_fallthru
        _
      %p182 = scmp.le.s32.totalorder 2, %s13
      // Predicated region
      $region33: #{tpu_custom_call.1} parent=5 // pred_check
        %p183 = pneg %p182
      $region34: #{tpu_custom_call.1} parent=5 // pred_check_branch
        %185 = sbr.rel (%p183) target = $region36
      $region35: #{tpu_custom_call.1} parent=5 // pred_region
        %s186 = ssub.s32 %s13, 2
        // Predicated region
        $region37: #{tpu_custom_call.1} parent=35 // pred_check
          %p187 = pneg %p84
        $region38: #{tpu_custom_call.1} parent=35 // pred_check_branch
          %189 = sbr.rel (%p187) target = $region40
        $region39: #{tpu_custom_call.1} parent=35 // pred_region
          %s190 = sand.u32 %s69, 1
          %s191 = scalar_lea.sflag [#allocation4], %s190
          %s192 = sand.u32 %s69, 1
          %s193 = smul.addr %s192, 16
          %s194 = scalar_lea.vmem [#allocation5], %s193
          %196 = dma.done %s191, 256
        $region40: #{tpu_custom_call.1} parent=35 // pred_fallthru
          _
      $region36: #{tpu_custom_call.1} parent=5 // pred_fallthru
        _
    $region6: #{tpu_custom_call.1} parent=1 // loop_footer
      %s17 = sadd.s32 1, %s13
    $region7: #{tpu_custom_call.1} parent=1 // loop_footer_branch
      %12 = sbr.rel target = $region3
    $region8: #{tpu_custom_call.1} parent=1 // loop_exit
      _
    %197 = vsyncpa [#allocation3], 1
    %s198 = scalar_lea.sflag [#allocation3], 1
    %199 = vsyncpa %s198, 1
    %200 = vsyncpa [#allocation4], 1
    %s201 = scalar_lea.sflag [#allocation4], 1
    %202 = vsyncpa %s201, 1

</llo_original>
